<compile_context>
chip_gen: v7x
topology: tpu7x:2x2x1
jax: 0.10.0
libtpu: 0.0.40
codegen_flags: <defaults>
</compile_context>

<pallas_src>
import jax
import jax.numpy as jnp
from jax.experimental import pallas as pl
from jax.experimental.pallas import tpu as pltpu


def _noise_injection_kernel(w_ref, x_ref, n_ref, o_ref):
    # w_ref: (1,) float32 scalar in SMEM; cast in-register to the tensor dtype.
    # x_ref / n_ref / o_ref: (TR, L) lane-dense VMEM tiles.
    w = w_ref[0].astype(x_ref.dtype)
    o_ref[...] = x_ref[...] + w * n_ref[...]


# Split tensors bigger than this into >=2 row tiles so v7x's two TensorCores
# both get work (single-TC v5e/v6e: harmless extra grid step).
_MEGACORE_SPLIT_BYTES = 4 << 20


def _vmem_budget():
    """Return (vmem_limit_bytes, per_buffer_tile_bytes) for this TPU generation."""
    try:
        cap = int(pltpu.get_tpu_info().vmem_capacity_bytes)
    except Exception:  # no TPU info available -> conservative (v7x per-TC) numbers
        cap = 64 << 20
    if cap >= (128 << 20):
        # v5e / v6e: 128 MiB physical. Must raise the scoped limit explicitly
        # (v5e default is only 16 MiB).
        limit = 64 << 20
    else:
        # v7x: 64 MiB physical per TensorCore.
        limit = 44 << 20
    # 6 live buffers (2 inputs + 1 output, each double-buffered) + headroom.
    return limit, limit // 8


def noise_injection(x: jax.Array, noise: jax.Array, weight: jax.Array,
                    *, donate_x: bool = False) -> jax.Array:
    """out = x + weight * noise, elementwise. x/noise: any shape, weight: shape (1,)."""
    assert x.shape == noise.shape, (x.shape, noise.shape)
    orig_shape = x.shape
    dtype = x.dtype
    itemsize = jnp.dtype(dtype).itemsize
    total = x.size

    # --- Pick a lane-dense width L (multiple of 128) that divides total exactly.
    L = None
    for cand in (4096, 2048, 1024, 512, 256, 128):
        if total % cand == 0:
            L = cand
            break
    if L is None:
        # Non-128-divisible total: padding + slicing would add two full HBM
        # copies to an already bandwidth-bound op.  Let XLA fuse the
        # elementwise fallback into a single pass instead.
        w = weight.reshape(()).astype(dtype)
        return x + w * noise

    rows = total // L
    x2 = x.reshape(rows, L)
    n2 = noise.reshape(rows, L)

    # --- Generation-aware row-tile size.
    vmem_limit, per_buf = _vmem_budget()
    sub = {1: 32, 2: 16, 4: 8}.get(itemsize, 8)  # sublane packing per dtype width
    tr = per_buf // (L * itemsize)
    tr = max(sub, (tr // sub) * sub)
    tensor_bytes = total * itemsize
    if tr >= rows:
        if tensor_bytes > _MEGACORE_SPLIT_BYTES and rows > sub:
            # Whole tensor fits one tile but is big enough to be worth
            # splitting across v7x's two TensorCores: use ~half the rows.
            tr = max(sub, ((pl.cdiv(rows, 2) + sub - 1) // sub) * sub)
        else:
            tr = rows  # full-dim block (divisibility-exempt)
    grid = (pl.cdiv(rows, tr),)

    # Weight stays float32 on the 32-bit SMEM scalar path; cast happens in-kernel.
    w = weight.reshape((1,)).astype(jnp.float32)

    cost = pl.CostEstimate(
        flops=2 * total,                       # one mul + one add per element
        transcendentals=0,
        bytes_accessed=3 * total * itemsize,   # read x, read noise, write out
    )

    out2 = pl.pallas_call(
        _noise_injection_kernel,
        out_shape=jax.ShapeDtypeStruct((rows, L), dtype),
        grid=grid,
        in_specs=[
            pl.BlockSpec(memory_space=pltpu.MemorySpace.SMEM),   # scalar weight
            pl.BlockSpec((tr, L), lambda i: (i, 0)),             # x row-tile
            pl.BlockSpec((tr, L), lambda i: (i, 0)),             # noise row-tile
        ],
        out_specs=pl.BlockSpec((tr, L), lambda i: (i, 0)),
        compiler_params=pltpu.CompilerParams(
            dimension_semantics=("parallel",),                   # megacore on v7x
            vmem_limit_bytes=vmem_limit,
        ),
        cost_estimate=cost,
        # Alias x -> out when the caller donates x (cuts peak HBM footprint).
        input_output_aliases=({1: 0} if donate_x else {}),
    )(w, x2, n2)

    return out2.reshape(orig_shape)


if __name__ == "__main__":
    key = jax.random.PRNGKey(0)
    kx, kn = jax.random.split(key)

    # Small NCHW shapes consistent with the module's usage.
    N, C, H, W = 2, 4, 16, 16
    x = jax.random.normal(kx, (N, C, H, W), dtype=jnp.float32)
    noise = jax.random.normal(kn, (N, C, H, W), dtype=jnp.float32)

    # Parameter init matches PyTorch: nn.Parameter(torch.zeros(1)).
    weight_zero = jnp.zeros((1,), dtype=jnp.float32)
    weight_nz = jnp.asarray([0.37], dtype=jnp.float32)

    out0 = jax.block_until_ready(noise_injection(x, noise, weight_zero))
    out1 = jax.block_until_ready(noise_injection(x, noise, weight_nz))
    ref0 = x + weight_zero[0] * noise
    ref1 = x + weight_nz[0] * noise
    assert out0.shape == x.shape and out0.dtype == x.dtype
    assert jnp.allclose(out0, ref0, atol=1e-6, rtol=1e-6)
    assert jnp.allclose(out1, ref1, atol=1e-6, rtol=1e-6)

    # Odd shape (total not a multiple of 128) exercises the fused jnp fallback
    # (no pad/slice copies).
    ko1, ko2 = jax.random.split(kn)
    xo = jax.random.normal(ko1, (2, 3, 5, 7), dtype=jnp.float32)
    no = jax.random.normal(ko2, (2, 3, 5, 7), dtype=jnp.float32)
    outo = jax.block_until_ready(noise_injection(xo, no, weight_nz))
    refo = xo + weight_nz[0] * no
    assert outo.shape == xo.shape
    assert jnp.allclose(outo, refo, atol=1e-6, rtol=1e-6)

    # Moderate tensor (> 4 MiB) exercises the multi-tile grid / megacore split.
    km1, km2 = jax.random.split(kx)
    xm = jax.random.normal(km1, (8, 16, 96, 96), dtype=jnp.float32)
    nm = jax.random.normal(km2, (8, 16, 96, 96), dtype=jnp.float32)
    outm = jax.block_until_ready(noise_injection(xm, nm, weight_nz))
    refm = xm + weight_nz[0] * nm
    assert jnp.allclose(outm, refm, atol=1e-6, rtol=1e-6)

    # bf16 path: weight stays f32 in SMEM, cast in-kernel.
    xb = x.astype(jnp.bfloat16)
    nb = noise.astype(jnp.bfloat16)
    outb = jax.block_until_ready(noise_injection(xb, nb, weight_nz))
    refb = xb + weight_nz.astype(jnp.bfloat16)[0] * nb
    assert outb.dtype == jnp.bfloat16
    assert jnp.allclose(outb.astype(jnp.float32), refb.astype(jnp.float32),
                        atol=2e-2, rtol=2e-2)

    # Donated-x path (input_output_aliases={1: 0}) under jit donation.
    donated_fn = jax.jit(
        lambda xx, nn, ww: noise_injection(xx, nn, ww, donate_x=True),
        donate_argnums=(0,),
    )
    xd = x + 1.0                      # fresh buffer we are free to donate
    refd = xd + weight_nz[0] * noise  # reference computed before donation
    outd = jax.block_until_ready(donated_fn(xd, noise, weight_nz))
    assert jnp.allclose(outd, refd, atol=1e-6, rtol=1e-6)

    print("KERNEL_OK")
</pallas_src>

<mosaic_0001>
module attributes {stable_mosaic.version = 11 : i64} {
  func.func @_noise_injection_kernel(%arg0: i32, %arg1: memref<1xf32, #tpu.memory_space<smem>>, %arg2: memref<1x2048xf32, #tpu.memory_space<vmem>>, %arg3: memref<1x2048xf32, #tpu.memory_space<vmem>>, %arg4: memref<1x2048xf32, #tpu.memory_space<vmem>>) attributes {dimension_semantics = [#tpu.dimension_semantics<parallel>], iteration_bounds = array<i64: 1>, scalar_prefetch = 0 : i64, scratch_operands = 0 : i64, tpu.core_type = #tpu.core_type<tc>, window_params = [{transform_indices = @transform_0, window_bounds = array<i64: 1>}, {transform_indices = @transform_1, window_bounds = array<i64: 1, 2048>}, {transform_indices = @transform_2, window_bounds = array<i64: 1, 2048>}, {transform_indices = @transform_3, window_bounds = array<i64: 1, 2048>}]} {
    %c0 = arith.constant 0 : index
    %0 = memref.load %arg1[%c0] : memref<1xf32, #tpu.memory_space<smem>>
    %c0_0 = arith.constant 0 : index
    %c0_1 = arith.constant 0 : index
    %1 = vector.load %arg2[%c0_0, %c0_1] : memref<1x2048xf32, #tpu.memory_space<vmem>>, vector<1x2048xf32>
    %c0_2 = arith.constant 0 : index
    %c0_3 = arith.constant 0 : index
    %2 = vector.load %arg3[%c0_2, %c0_3] : memref<1x2048xf32, #tpu.memory_space<vmem>>, vector<1x2048xf32>
    %3 = vector.broadcast %0 : f32 to vector<1x2048xf32>
    %4 = arith.mulf %3, %2 : vector<1x2048xf32>
    %5 = arith.addf %1, %4 : vector<1x2048xf32>
    %c0_4 = arith.constant 0 : index
    %c0_5 = arith.constant 0 : index
    %6 = vector.load %arg4[%c0_4, %c0_5] : memref<1x2048xf32, #tpu.memory_space<vmem>>, vector<1x2048xf32>
    tpu.vector_store %arg4[%c0_4, %c0_5], %5 {strides = array<i32>} : memref<1x2048xf32, #tpu.memory_space<vmem>>, vector<1x2048xf32>,
    return
  }
  func.func @transform_0(%arg0: i32) -> i32 {
    %c0_i32 = arith.constant 0 : i32
    %c0_i32_0 = arith.constant 0 : i32
    return %c0_i32 : i32
  }
  func.func @transform_1(%arg0: i32) -> (i32, i32) {
    %c0_i32 = arith.constant 0 : i32
    %c0_i32_0 = arith.constant 0 : i32
    return %arg0, %c0_i32 : i32, i32
  }
  func.func @transform_2(%arg0: i32) -> (i32, i32) {
    %c0_i32 = arith.constant 0 : i32
    %c0_i32_0 = arith.constant 0 : i32
    return %arg0, %c0_i32 : i32, i32
  }
  func.func @transform_3(%arg0: i32) -> (i32, i32) {
    %c0_i32 = arith.constant 0 : i32
    %c0_i32_0 = arith.constant 0 : i32
    return %arg0, %c0_i32 : i32, i32
  }
}

</mosaic_0001>

<llo_original>
// kernel: tpu_custom_call.1
$region0: #{tpu_custom_call.1}
  #allocation0 [shape = 'u32[]', space=smem, size = 0x4, offset = 0x4, fixed_abs, tag = 'smem constant byte address 0x4 - core index']
  #allocation1 [shape = 'u32[144,128]{1,0:T(1,128)}', space=vmem, size = 0x12000, scoped, tag = 'internal scratch']
  #allocation2 [shape = 'f32[1]{0:T(128)S(6)}', space=smem, size = 0x200, scoped, tag = 'scoped memory for tpu_custom_call.1']
  %s0 = inlined_call_operand.<no memory space> [shape: f32[1], index: 0, kind: input, shape index: {}]
  %s1 = inlined_call_operand.hbm [shape: f32[1,2048], index: 1, kind: input, shape index: {}]
  %s2 = inlined_call_operand.hbm [shape: f32[1,2048], index: 2, kind: input, shape index: {}]
  %s3 = inlined_call_operand.hbm [shape: f32[1,2048], index: 3, kind: output, shape index: {}]
  %s4 = sld [smem:[#allocation0]]
  $region30: #{tpu_custom_call.1} parent=0
    _
  %s6 = ssub.s32 1, %s4
  %s7 = scalar_select 0, %s6, %s4
  %8 = sst [smem:[#allocation2]] %s0
  $region1: #{tpu_custom_call.1} parent=0
    #allocation3 [shape = 'u8[8192]{0}', space=vmem, size = 0x2000, scoped, tag = 'input window, operand 1, single buffered']
    #allocation4 [shape = 's32[1]{0}', space=sflag, size = 0x4, scoped, tag = 'scoped memory for tpu_custom_call.1']
    #allocation5 [shape = 's32[1]{0}', space=sflag, size = 0x4, scoped, tag = 'scoped memory for tpu_custom_call.1']
    #allocation6 [shape = 'u8[8192]{0}', space=vmem, size = 0x2000, scoped, tag = 'input window, operand 2, single buffered']
    #allocation7 [shape = 's32[1]{0}', space=sflag, size = 0x4, scoped, tag = 'scoped memory for tpu_custom_call.1']
    #allocation8 [shape = 'u8[8192]{0}', space=vmem, size = 0x2000, scoped, tag = 'output window, operand 0, single buffered']
    %9 = vsyncpa [#allocation4], 0
    %10 = vsyncpa [#allocation7], 0
    %11 = vsyncpa [#allocation5], 0
    // Predicated region
    $region2: #{tpu_custom_call.1} parent=1 // pred_check
      _
    $region3: #{tpu_custom_call.1} parent=1 // pred_check_branch
      %13 = sbr.rel (0) target = $region5
    $region4: #{tpu_custom_call.1} parent=1 // pred_region
      _
    $region5: #{tpu_custom_call.1} parent=1 // pred_fallthru
      _
    // Predicated region
    $region6: #{tpu_custom_call.1} parent=1 // pred_check
      _
    $region7: #{tpu_custom_call.1} parent=1 // pred_check_branch
      %15 = sbr.rel (0) target = $region9
    $region8: #{tpu_custom_call.1} parent=1 // pred_region
      %s17 = ssub.s32 256, 256
      %18 = vsyncadd [#allocation4], %s17
      %s20 = sshll.u32 [#allocation3], 4
      %s21 = int_to_ptr.vmem [resolvable:$true] %s20
      %23 = dma.hbm_to_vmem [thread:$0]  %s1, 256, %s21, [#allocation4]
    $region9: #{tpu_custom_call.1} parent=1 // pred_fallthru
      _
    // Predicated region
    $region10: #{tpu_custom_call.1} parent=1 // pred_check
      _
    $region11: #{tpu_custom_call.1} parent=1 // pred_check_branch
      %25 = sbr.rel (0) target = $region13
    $region12: #{tpu_custom_call.1} parent=1 // pred_region
      %s27 = ssub.s32 256, 256
      %28 = vsyncadd [#allocation7], %s27
      %s30 = sshll.u32 [#allocation6], 4
      %s31 = int_to_ptr.vmem [resolvable:$true] %s30
      %33 = dma.hbm_to_vmem [thread:$0]  %s2, 256, %s31, [#allocation7]
    $region13: #{tpu_custom_call.1} parent=1 // pred_fallthru
      _
    // Predicated region
    $region14: #{tpu_custom_call.1} parent=1 // pred_check
      _
    $region15: #{tpu_custom_call.1} parent=1 // pred_check_branch
      %35 = sbr.rel (0) target = $region17
    $region16: #{tpu_custom_call.1} parent=1 // pred_region
      %36 = dma.done [#allocation4], 256
    $region17: #{tpu_custom_call.1} parent=1 // pred_fallthru
      _
    // Predicated region
    $region18: #{tpu_custom_call.1} parent=1 // pred_check
      _
    $region19: #{tpu_custom_call.1} parent=1 // pred_check_branch
      %38 = sbr.rel (0) target = $region21
    $region20: #{tpu_custom_call.1} parent=1 // pred_region
      %39 = dma.done [#allocation7], 256
    $region21: #{tpu_custom_call.1} parent=1 // pred_fallthru
      _
    %s40 = sld [smem:[#allocation2]]
    %v41 = vld [vmem:[#allocation3] sm:$0xff]
    %v42 = vld [vmem:[#allocation3 + $0x8] sm:$0xff]
    %v43 = vld [vmem:[#allocation6] sm:$0xff]
    %v44 = vld [vmem:[#allocation6 + $0x8] sm:$0xff]
    %v45 = vstv %s40
    %v46 = vmul.f32 %v45, %v43
    %v47 = vmul.f32 %v45, %v44
    %v48 = vadd.f32 %v41, %v46
    %v49 = vadd.f32 %v42, %v47
    %50 = vst [vmem:[#allocation8] sm:$0xff] %v48
    %51 = vst [vmem:[#allocation8 + $0x8] sm:$0xff] %v49
    // Predicated region
    $region22: #{tpu_custom_call.1} parent=1 // pred_check
      _
    $region23: #{tpu_custom_call.1} parent=1 // pred_check_branch
      %53 = sbr.rel (0) target = $region25
    $region24: #{tpu_custom_call.1} parent=1 // pred_region
      %s55 = ssub.s32 256, 256
      %56 = vsyncadd [#allocation5], %s55
      %s58 = sshll.u32 [#allocation8], 4
      %s59 = int_to_ptr.vmem [resolvable:$true] %s58
      %61 = dma.vmem_to_hbm [thread:$0]  %s59, 256, %s3, [#allocation5]
    $region25: #{tpu_custom_call.1} parent=1 // pred_fallthru
      _
    // Predicated region
    $region26: #{tpu_custom_call.1} parent=1 // pred_check
      _
    $region27: #{tpu_custom_call.1} parent=1 // pred_check_branch
      %63 = sbr.rel (0) target = $region29
    $region28: #{tpu_custom_call.1} parent=1 // pred_region
      %64 = dma.done [#allocation5], 256
    $region29: #{tpu_custom_call.1} parent=1 // pred_fallthru
      _
    %65 = vsyncpa [#allocation4], 1
    %66 = vsyncpa [#allocation7], 1
    %67 = vsyncpa [#allocation5], 1

</llo_original>
